<compile_context>
chip_gen: v7x
topology: tpu7x:2x2x1
jax: 0.10.0
libtpu: 0.0.40
codegen_flags: <defaults>
</compile_context>

<pallas_src>
import jax
import jax.numpy as jnp
from jax.experimental import pallas as pl
from jax.experimental.pallas import tpu as pltpu


def _identity_copy_kernel(x_ref, o_ref):
    # The entire "forward" of NoSEBlock: pass the tile through unchanged.
    o_ref[...] = x_ref[...]


def no_se_block(x: jax.Array) -> jax.Array:
    """Pallas implementation of NoSEBlock.forward: returns x unchanged.

    x: NCHW array (any dtype supported by VMEM).
    """
    orig_shape = x.shape
    total = x.size

    # Pick the widest lane count that evenly divides the flattened tensor so
    # the last dim is a large multiple of 128 (full unmasked vector stores,
    # contiguous DMA descriptors).
    lane = None
    for cand in (1024, 512, 256, 128):
        if total % cand == 0:
            lane = cand
            break
    if lane is None:
        # Can't make it lane-dense without padding; fall back to a single
        # full-extent block (legal: block == full array dims).
        lane = total
        rows = 1
    else:
        rows = total // lane

    x2 = x.reshape(rows, lane)

    # Row tile: full extent for small tensors; otherwise 1024 rows (multiple of
    # 8 sublanes). At lane=1024, f32 that is a 4 MiB block -> 16 MiB resident
    # with double-buffered input + output, within the default scoped VMEM on
    # all generations (v5e/v6e/v7x).
    tile_r = rows if rows <= 1024 else 1024
    grid = (pl.cdiv(rows, tile_r),)

    out2 = pl.pallas_call(
        _identity_copy_kernel,
        out_shape=jax.ShapeDtypeStruct((rows, lane), x2.dtype),
        grid=grid,
        in_specs=[pl.BlockSpec((tile_r, lane), lambda i: (i, 0))],
        out_specs=pl.BlockSpec((tile_r, lane), lambda i: (i, 0)),
        # Output aliases the input buffer: no extra HBM allocation; for an
        # identity op the data written back is bit-identical to what is there.
        input_output_aliases={0: 0},
        compiler_params=pltpu.CompilerParams(
            dimension_semantics=("parallel",),
        ),
    )(x2)

    return out2.reshape(orig_shape)


if __name__ == "__main__":
    key = jax.random.PRNGKey(0)
    # NoSEBlock(input_dim, reduction) has no parameters; forward is identity.
    x = jax.random.normal(key, (2, 4, 16, 16), dtype=jnp.float32)

    # Snapshot the reference on the host before the call: the pallas_call
    # aliases/donates its (reshaped) input buffer.
    x_host = jax.device_get(x)

    y = jax.jit(no_se_block)(x)
    jax.block_until_ready(y)

    assert y.shape == tuple(x_host.shape) and y.dtype == x_host.dtype
    assert (jax.device_get(y) == x_host).all()
    print("KERNEL_OK")
</pallas_src>

<mosaic_0001>
module attributes {stable_mosaic.version = 11 : i64} {
  func.func @_identity_copy_kernel(%arg0: i32, %arg1: memref<2x1024xf32, #tpu.memory_space<vmem>>, %arg2: memref<2x1024xf32, #tpu.memory_space<vmem>>) attributes {dimension_semantics = [#tpu.dimension_semantics<parallel>], iteration_bounds = array<i64: 1>, scalar_prefetch = 0 : i64, scratch_operands = 0 : i64, tpu.core_type = #tpu.core_type<tc>, window_params = [{transform_indices = @transform_0, window_bounds = array<i64: 2, 1024>}, {transform_indices = @transform_1, window_bounds = array<i64: 2, 1024>}]} {
    %c0 = arith.constant 0 : index
    %c0_0 = arith.constant 0 : index
    %0 = vector.load %arg1[%c0, %c0_0] : memref<2x1024xf32, #tpu.memory_space<vmem>>, vector<2x1024xf32>
    %c0_1 = arith.constant 0 : index
    %c0_2 = arith.constant 0 : index
    %1 = vector.load %arg2[%c0_1, %c0_2] : memref<2x1024xf32, #tpu.memory_space<vmem>>, vector<2x1024xf32>
    tpu.vector_store %arg2[%c0_1, %c0_2], %0 {strides = array<i32>} : memref<2x1024xf32, #tpu.memory_space<vmem>>, vector<2x1024xf32>,
    return
  }
  func.func @transform_0(%arg0: i32) -> (i32, i32) {
    %c0_i32 = arith.constant 0 : i32
    %c0_i32_0 = arith.constant 0 : i32
    return %arg0, %c0_i32 : i32, i32
  }
  func.func @transform_1(%arg0: i32) -> (i32, i32) {
    %c0_i32 = arith.constant 0 : i32
    %c0_i32_0 = arith.constant 0 : i32
    return %arg0, %c0_i32 : i32, i32
  }
}

</mosaic_0001>

<llo_original>
// kernel: no_se_block.1
$region0: #{no_se_block.1}
  #allocation0 [shape = 'u32[]', space=smem, size = 0x4, offset = 0x4, fixed_abs, tag = 'smem constant byte address 0x4 - core index']
  #allocation1 [shape = 'u32[144,128]{1,0:T(1,128)}', space=vmem, size = 0x12000, scoped, tag = 'internal scratch']
  %s0 = inlined_call_operand.vmem [shape: f32[2,1024], index: 0, kind: input, shape index: {}, may-alias: {0,1}]
  %s1 = inlined_call_operand.vmem [shape: f32[2,1024], index: 1, kind: output, shape index: {}, may-alias: {0,1}]
  %s2 = sld [smem:[#allocation0]]
  $region14: #{no_se_block.1} parent=0
    _
  %s4 = ssub.s32 1, %s2
  %s5 = scalar_select 0, %s4, %s2
  // Predicated region
  $region2: #{no_se_block.1} parent=0 // pred_check
    _
  $region3: #{no_se_block.1} parent=0 // pred_check_branch
    %7 = sbr.rel (0) target = $region5
  $region4: #{no_se_block.1} parent=0 // pred_region
    _
  $region5: #{no_se_block.1} parent=0 // pred_fallthru
    _
  %v8 = vld [vmem:[%s0] sm:$0xff]
  %v9 = vld [vmem:[%s0 + $0x8] sm:$0xff]
  %10 = vst [vmem:[%s1] sm:$0xff] %v8
  %11 = vst [vmem:[%s1 + $0x8] sm:$0xff] %v9
  // Predicated region
  $region6: #{no_se_block.1} parent=0 // pred_check
    _
  $region7: #{no_se_block.1} parent=0 // pred_check_branch
    %13 = sbr.rel (0) target = $region9
  $region8: #{no_se_block.1} parent=0 // pred_region
    _
  $region9: #{no_se_block.1} parent=0 // pred_fallthru
    _
  // Predicated region
  $region10: #{no_se_block.1} parent=0 // pred_check
    _
  $region11: #{no_se_block.1} parent=0 // pred_check_branch
    %15 = sbr.rel (0) target = $region13
  $region12: #{no_se_block.1} parent=0 // pred_region
    _
  $region13: #{no_se_block.1} parent=0 // pred_fallthru
    _

</llo_original>
